<compile_context>
chip_gen: v5e
topology: v5e:2x2
jax: 0.10.0
libtpu: 0.0.40
codegen_flags: <defaults>
</compile_context>

<pallas_src>
import jax
import jax.numpy as jnp
from jax import lax
from jax.experimental import pallas as pl
from jax.experimental.pallas import tpu as pltpu


_SQRT_HALF = 0.7071067811865476


def _gelu_exact(x):
    # PyTorch nn.GELU() default: exact erf formulation.
    return 0.5 * x * (1.0 + lax.erf(x * _SQRT_HALF))


# --------------------------------------------------------------------------- #
# Kernel: grid = (batch tiles, hidden tiles).  acc (TB, Fp) f32 scratch holds
# x + b2 + sum_k GELU(x @ W1t[:, k] + b1[k]) @ W2t[k, :].
# --------------------------------------------------------------------------- #
def _residual_block_kernel(x_ref, w1t_ref, b1_ref, w2t_ref, b2_ref, o_ref, acc_ref):
    k = pl.program_id(1)

    x = x_ref[...]                                        # (TB, Fp), activation dtype

    @pl.when(k == 0)
    def _init():
        # Seed accumulator with residual + output bias.
        acc_ref[...] = x.astype(jnp.float32) + b2_ref[...].astype(jnp.float32)

    # Linear 1 (hidden slice k):  (TB, Fp) @ (Fp, TK) -> (TB, TK), f32 accumulate.
    xm = x.astype(w1t_ref.dtype)                          # MXU input dtype follows weights
    h = jnp.dot(xm, w1t_ref[...], preferred_element_type=jnp.float32)
    h = _gelu_exact(h + b1_ref[...].astype(jnp.float32))

    # Linear 2 partial:  (TB, TK) @ (TK, Fp) -> (TB, Fp), accumulate in f32.
    acc_ref[...] += jnp.dot(h.astype(w2t_ref.dtype), w2t_ref[...],
                            preferred_element_type=jnp.float32)

    @pl.when(k == pl.num_programs(1) - 1)
    def _finalize():
        o_ref[...] = acc_ref[...].astype(o_ref.dtype)


# --------------------------------------------------------------------------- #
# Sizing helpers.
# --------------------------------------------------------------------------- #
def _round_up(n, m):
    return ((n + m - 1) // m) * m


def _ceil_div(a, b):
    return (a + b - 1) // b


def _vmem_limit_bytes():
    """Per-generation VMEM limit: physical capacity minus headroom, clamped."""
    try:
        cap = int(pltpu.get_tpu_info().vmem_capacity_bytes)
    except Exception:
        cap = 64 << 20                      # conservative fallback (v7x per-TC)
    # 128 MiB parts -> 112 MiB; 64 MiB parts (v7x) -> 48 MiB.
    return max(32 << 20, min(cap - (16 << 20), 112 << 20))


def _working_set_bytes(Fp, tb, tk, w_bytes, act_bytes):
    """Conservative resident-VMEM estimate for one grid step."""
    weights = 2 * 2 * Fp * tk * w_bytes       # W1t + W2t blocks, double-buffered
    biases = 2 * 2 * (tk + Fp) * 4            # b1 + b2 blocks, double-buffered, f32
    acts = tb * Fp * (4 * act_bytes + 4)      # x, out (2 bufs each) + f32 acc scratch
    interm = tb * (tk + 2 * Fp) * 4           # f32 h and dot results materialized
    return weights + biases + acts + interm


def _choose_batch_tile(B, tb_cap):
    """Big enough to amortize ~0.35us/step overhead and fill the MXU, >=2 tiles
    when the batch allows (v7x megacore), low padding waste, fits VMEM cap."""
    tb_cap = max(8, min((tb_cap // 8) * 8, 1024))
    B8 = _round_up(B, 8)
    if B8 <= 16 or tb_cap == 8:
        return min(B8, tb_cap)
    if B8 <= min(2 * tb_cap, 2048):
        # Two tiles -> both v7x TensorCores get work; minimal padding.
        return min(_round_up(_ceil_div(B8, 2), 8), tb_cap)
    cands = [c for c in (1024, 768, 512, 384, 256, 192, 128) if c <= tb_cap]
    if not cands:
        cands = [tb_cap]
    return min(cands, key=lambda c: (_round_up(B, c) - B, -c))


def _choose_hidden_tile(Fp, tb, w_bytes, act_bytes, budget, max_hidden_tile=None):
    """Largest hidden-dim tile (multiple of 128) whose working set fits."""
    cap = Fp if max_hidden_tile is None else max(128, min(Fp, _round_up(max_hidden_tile, 128)))
    nk = 1
    while True:
        tk = min(cap, _round_up(_ceil_div(Fp, nk), 128))
        if tk == 128 or _working_set_bytes(Fp, tb, tk, w_bytes, act_bytes) <= budget:
            return tk
        nk += 1


def _pad_to(a, shape):
    pads = [(0, t - s) for s, t in zip(a.shape, shape)]
    if any(p[1] for p in pads):
        return jnp.pad(a, pads)
    return a


# --------------------------------------------------------------------------- #
# Wrapper.
# --------------------------------------------------------------------------- #
def residual_block(x, w1, b1, w2, b2, *, mxu_dtype=None, max_hidden_tile=None):
    """Fused  x + Linear2(GELU(Linear1(x))).

    x: (B, F).  w1, w2: PyTorch Linear weights (out_features, in_features) = (F, F).
    b1, b2: (F,).  mxu_dtype: optional MXU input dtype (e.g. jnp.bfloat16) with f32
    accumulation; None keeps the weight dtype (exact).  max_hidden_tile: optional
    cap on the hidden-dim tile (testing / VMEM control).
    """
    B, F = x.shape
    assert w1.shape == (F, F) and w2.shape == (F, F)
    assert b1.shape == (F,) and b2.shape == (F,)

    act_dtype = x.dtype
    act_bytes = jnp.dtype(act_dtype).itemsize
    w_dtype = jnp.dtype(mxu_dtype) if mxu_dtype is not None else jnp.dtype(w1.dtype)
    w_bytes = w_dtype.itemsize

    Fp = _round_up(F, 128)                          # lane-dense feature axis

    vmem_limit = _vmem_limit_bytes()
    budget = vmem_limit - (8 << 20)                 # headroom for compiler scratch

    # Batch tile bounded by roughly half the budget (activations + intermediates).
    per_row = Fp * (4 * act_bytes + 16)
    tb_cap = max(8, (budget // 2) // per_row)
    TB = _choose_batch_tile(B, tb_cap)

    # Hidden-dim tile (contraction axis of the 2nd matmul), multiple of 128.
    TK = _choose_hidden_tile(Fp, TB, w_bytes, act_bytes, budget, max_hidden_tile)
    while _working_set_bytes(Fp, TB, TK, w_bytes, act_bytes) > budget and TB > 8:
        TB = max(8, _round_up(TB // 2, 8))

    nk = _ceil_div(Fp, TK)
    Hp = nk * TK                                    # padded hidden dimension
    B_pad = _round_up(B, TB)
    nb = B_pad // TB

    # One-time wrapper-side transpose / pad / cast: the kernel contracts both
    # weights on their leading axis (no in-kernel relayout), padding is all-zero
    # so padded rows/columns contribute exactly zero (GELU(0) == 0).
    x_p = _pad_to(x, (B_pad, Fp))
    w1t = _pad_to(jnp.transpose(w1).astype(w_dtype), (Fp, Hp))
    w2t = _pad_to(jnp.transpose(w2).astype(w_dtype), (Hp, Fp))
    b1_p = _pad_to(b1.reshape(1, F).astype(jnp.float32), (1, Hp))
    b2_p = _pad_to(b2.reshape(1, F).astype(jnp.float32), (1, Fp))

    grid = (nb, nk)

    x_spec = pl.BlockSpec((TB, Fp), lambda i, k: (i, 0))    # constant over k -> resident
    w1_spec = pl.BlockSpec((Fp, TK), lambda i, k: (0, k))
    b1_spec = pl.BlockSpec((1, TK), lambda i, k: (0, k))
    w2_spec = pl.BlockSpec((TK, Fp), lambda i, k: (k, 0))
    b2_spec = pl.BlockSpec((1, Fp), lambda i, k: (0, 0))
    o_spec = pl.BlockSpec((TB, Fp), lambda i, k: (i, 0))

    weight_reads = 1 if nk == 1 else nb             # resident weights when nk == 1
    cost = pl.CostEstimate(
        flops=4 * B_pad * Fp * Hp,                  # two (B,Fp)x(Fp,Hp)-class matmuls
        transcendentals=B_pad * Hp,                 # erf in GELU
        bytes_accessed=(2 * B_pad * Fp * act_bytes
                        + weight_reads * 2 * Fp * Hp * w_bytes
                        + (Hp + Fp) * 4),
    )

    out = pl.pallas_call(
        _residual_block_kernel,
        out_shape=jax.ShapeDtypeStruct((B_pad, Fp), act_dtype),
        grid_spec=pltpu.PrefetchScalarGridSpec(
            num_scalar_prefetch=0,
            grid=grid,
            in_specs=[x_spec, w1_spec, b1_spec, w2_spec, b2_spec],
            out_specs=o_spec,
            scratch_shapes=[pltpu.VMEM((TB, Fp), jnp.float32)],
        ),
        compiler_params=pltpu.CompilerParams(
            dimension_semantics=("parallel", "arbitrary"),
            vmem_limit_bytes=vmem_limit,
        ),
        cost_estimate=cost,
    )(x_p, w1t, b1_p, w2t, b2_p)

    if B_pad != B or Fp != F:
        out = out[:B, :F]
    return out


def reference(x, w1, b1, w2, b2):
    h = x @ w1.T + b1
    h = 0.5 * h * (1.0 + lax.erf(h * _SQRT_HALF))
    y = h @ w2.T + b2
    return x + y


if __name__ == "__main__":
    key = jax.random.PRNGKey(0)

    def make_inputs(k, B, F):
        kx, kw1, kb1, kw2, kb2 = jax.random.split(k, 5)
        bound = 1.0 / float(F) ** 0.5
        x = jax.random.normal(kx, (B, F), dtype=jnp.float32)
        w1 = jax.random.uniform(kw1, (F, F), minval=-bound, maxval=bound, dtype=jnp.float32)
        b1 = jax.random.uniform(kb1, (F,), minval=-bound, maxval=bound, dtype=jnp.float32)
        w2 = jax.random.uniform(kw2, (F, F), minval=-bound, maxval=bound, dtype=jnp.float32)
        b2 = jax.random.uniform(kb2, (F,), minval=-bound, maxval=bound, dtype=jnp.float32)
        return x, w1, b1, w2, b2

    k1, k2 = jax.random.split(key)

    # 1) Small shape, f32 MXU inputs: resident weights (nk == 1), exact semantics.
    x, w1, b1, w2, b2 = make_inputs(k1, 8, 128)
    out = jax.block_until_ready(residual_block(x, w1, b1, w2, b2))
    ref = reference(x, w1, b1, w2, b2)
    assert out.shape == x.shape
    assert jnp.allclose(out, ref, atol=1e-5, rtol=1e-5), "f32 resident-weight path mismatch"

    # 2) Exercise the batch-tiled + hidden-dim-tiled (split-K accumulate) path.
    x2, w1b, b1b, w2b, b2b = make_inputs(k2, 24, 256)
    out2 = jax.block_until_ready(
        residual_block(x2, w1b, b1b, w2b, b2b, max_hidden_tile=128))
    ref2 = reference(x2, w1b, b1b, w2b, b2b)
    assert out2.shape == x2.shape
    assert jnp.allclose(out2, ref2, atol=1e-4, rtol=1e-5), "hidden-tiled path mismatch"

    # 3) bf16 MXU inputs, f32 accumulation (throughput mode) — looser tolerance.
    out3 = jax.block_until_ready(residual_block(x, w1, b1, w2, b2, mxu_dtype=jnp.bfloat16))
    assert jnp.allclose(out3, ref, atol=5e-2, rtol=5e-2), "bf16 MXU path mismatch"

    print("KERNEL_OK")
</pallas_src>

<mosaic_0001>
module attributes {stable_mosaic.version = 11 : i64} {
  func.func @_residual_block_kernel(%arg0: i32, %arg1: i32, %arg2: memref<8x128xf32, #tpu.memory_space<vmem>>, %arg3: memref<128x128xf32, #tpu.memory_space<vmem>>, %arg4: memref<1x128xf32, #tpu.memory_space<vmem>>, %arg5: memref<128x128xf32, #tpu.memory_space<vmem>>, %arg6: memref<1x128xf32, #tpu.memory_space<vmem>>, %arg7: memref<8x128xf32, #tpu.memory_space<vmem>>, %arg8: memref<8x128xf32, #tpu.memory_space<vmem>>) attributes {dimension_semantics = [#tpu.dimension_semantics<parallel>, #tpu.dimension_semantics<arbitrary>], iteration_bounds = array<i64: 1, 1>, scalar_prefetch = 0 : i64, scratch_operands = 1 : i64, tpu.core_type = #tpu.core_type<tc>, window_params = [{transform_indices = @transform_0, window_bounds = array<i64: 8, 128>}, {transform_indices = @transform_1, window_bounds = array<i64: 128, 128>}, {transform_indices = @transform_2, window_bounds = array<i64: 1, 128>}, {transform_indices = @transform_3, window_bounds = array<i64: 128, 128>}, {pipeline_mode = #tpu.pipeline_mode<synchronous>, transform_indices = @transform_4, window_bounds = array<i64: 1, 128>}, {transform_indices = @transform_5, window_bounds = array<i64: 8, 128>}]} {
    %c0 = arith.constant 0 : index
    %c0_0 = arith.constant 0 : index
    %0 = vector.load %arg2[%c0, %c0_0] : memref<8x128xf32, #tpu.memory_space<vmem>>, vector<8x128xf32>
    %c0_i32 = arith.constant 0 : i32
    %1 = arith.cmpi eq, %arg1, %c0_i32 : i32
    %2 = arith.extui %1 : i1 to i32
    %c0_i32_1 = arith.constant 0 : i32
    %3 = arith.cmpi ne, %2, %c0_i32_1 : i32
    scf.if %3 {
      %c0_18 = arith.constant 0 : index
      %c0_19 = arith.constant 0 : index
      %25 = vector.load %arg6[%c0_18, %c0_19] : memref<1x128xf32, #tpu.memory_space<vmem>>, vector<1x128xf32>
      %26 = vector.broadcast %25 : vector<1x128xf32> to vector<8x128xf32>
      %27 = arith.addf %0, %26 : vector<8x128xf32>
      %c0_20 = arith.constant 0 : index
      %c0_21 = arith.constant 0 : index
      %28 = vector.load %arg8[%c0_20, %c0_21] : memref<8x128xf32, #tpu.memory_space<vmem>>, vector<8x128xf32>
      tpu.vector_store %arg8[%c0_20, %c0_21], %27 {strides = array<i32>} : memref<8x128xf32, #tpu.memory_space<vmem>>, vector<8x128xf32>,
    } else {
    }
    %c0_2 = arith.constant 0 : index
    %c0_3 = arith.constant 0 : index
    %4 = vector.load %arg3[%c0_2, %c0_3] : memref<128x128xf32, #tpu.memory_space<vmem>>, vector<128x128xf32>
    %cst = arith.constant dense<0.000000e+00> : vector<8x128xf32>
    %5 = tpu.matmul %0, %4, %cst {dimension_numbers = #tpu.dot_dimension_numbers<[1], [0], [0], [1], [0, 0, 1, 1], [], []>} : vector<8x128xf32>, vector<128x128xf32>, vector<8x128xf32> -> vector<8x128xf32>
    %c0_4 = arith.constant 0 : index
    %c0_5 = arith.constant 0 : index
    %6 = vector.load %arg4[%c0_4, %c0_5] : memref<1x128xf32, #tpu.memory_space<vmem>>, vector<1x128xf32>
    %7 = vector.broadcast %6 : vector<1x128xf32> to vector<8x128xf32>
    %8 = arith.addf %5, %7 : vector<8x128xf32>
    %cst_6 = arith.constant 5.000000e-01 : f32
    %9 = vector.broadcast %cst_6 : f32 to vector<8x128xf32>
    %10 = arith.mulf %9, %8 : vector<8x128xf32>
    %cst_7 = arith.constant 0.707106769 : f32
    %11 = vector.broadcast %cst_7 : f32 to vector<8x128xf32>
    %12 = arith.mulf %8, %11 : vector<8x128xf32>
    %13 = math.erf %12 : vector<8x128xf32>
    %cst_8 = arith.constant 1.000000e+00 : f32
    %14 = vector.broadcast %cst_8 : f32 to vector<8x128xf32>
    %15 = arith.addf %14, %13 : vector<8x128xf32>
    %16 = arith.mulf %10, %15 : vector<8x128xf32>
    %c0_9 = arith.constant 0 : index
    %c0_10 = arith.constant 0 : index
    %17 = vector.load %arg8[%c0_9, %c0_10] : memref<8x128xf32, #tpu.memory_space<vmem>>, vector<8x128xf32>
    %c0_11 = arith.constant 0 : index
    %c0_12 = arith.constant 0 : index
    %18 = vector.load %arg5[%c0_11, %c0_12] : memref<128x128xf32, #tpu.memory_space<vmem>>, vector<128x128xf32>
    %cst_13 = arith.constant dense<0.000000e+00> : vector<8x128xf32>
    %19 = tpu.matmul %16, %18, %cst_13 {dimension_numbers = #tpu.dot_dimension_numbers<[1], [0], [0], [1], [0, 0, 1, 1], [], []>} : vector<8x128xf32>, vector<128x128xf32>, vector<8x128xf32> -> vector<8x128xf32>
    %20 = arith.addf %17, %19 : vector<8x128xf32>
    %c0_14 = arith.constant 0 : index
    %c0_15 = arith.constant 0 : index
    %21 = vector.load %arg8[%c0_14, %c0_15] : memref<8x128xf32, #tpu.memory_space<vmem>>, vector<8x128xf32>
    tpu.vector_store %arg8[%c0_14, %c0_15], %20 {strides = array<i32>} : memref<8x128xf32, #tpu.memory_space<vmem>>, vector<8x128xf32>,
    %c0_i32_16 = arith.constant 0 : i32
    %22 = arith.cmpi eq, %arg1, %c0_i32_16 : i32
    %23 = arith.extui %22 : i1 to i32
    %c0_i32_17 = arith.constant 0 : i32
    %24 = arith.cmpi ne, %23, %c0_i32_17 : i32
    scf.if %24 {
      %c0_18 = arith.constant 0 : index
      %c0_19 = arith.constant 0 : index
      %25 = vector.load %arg8[%c0_18, %c0_19] : memref<8x128xf32, #tpu.memory_space<vmem>>, vector<8x128xf32>
      %c0_20 = arith.constant 0 : index
      %c0_21 = arith.constant 0 : index
      %26 = vector.load %arg7[%c0_20, %c0_21] : memref<8x128xf32, #tpu.memory_space<vmem>>, vector<8x128xf32>
      tpu.vector_store %arg7[%c0_20, %c0_21], %25 {strides = array<i32>} : memref<8x128xf32, #tpu.memory_space<vmem>>, vector<8x128xf32>,
    } else {
    }
    return
  }
  func.func @transform_0(%arg0: i32, %arg1: i32) -> (i32, i32) {
    %c0_i32 = arith.constant 0 : i32
    %c0_i32_0 = arith.constant 0 : i32
    return %arg0, %c0_i32 : i32, i32
  }
  func.func @transform_1(%arg0: i32, %arg1: i32) -> (i32, i32) {
    %c0_i32 = arith.constant 0 : i32
    %c0_i32_0 = arith.constant 0 : i32
    return %c0_i32, %arg1 : i32, i32
  }
  func.func @transform_2(%arg0: i32, %arg1: i32) -> (i32, i32) {
    %c0_i32 = arith.constant 0 : i32
    %c0_i32_0 = arith.constant 0 : i32
    return %c0_i32, %arg1 : i32, i32
  }
  func.func @transform_3(%arg0: i32, %arg1: i32) -> (i32, i32) {
    %c0_i32 = arith.constant 0 : i32
    %c0_i32_0 = arith.constant 0 : i32
    return %arg1, %c0_i32 : i32, i32
  }
  func.func @transform_4(%arg0: i32, %arg1: i32) -> (i32, i32) {
    %c0_i32 = arith.constant 0 : i32
    %c0_i32_0 = arith.constant 0 : i32
    %c0_i32_1 = arith.constant 0 : i32
    return %c0_i32, %c0_i32_0 : i32, i32
  }
  func.func @transform_5(%arg0: i32, %arg1: i32) -> (i32, i32) {
    %c0_i32 = arith.constant 0 : i32
    %c0_i32_0 = arith.constant 0 : i32
    return %arg0, %c0_i32 : i32, i32
  }
}

</mosaic_0001>

<llo_original>
// kernel: tpu_custom_call.1
$region0: #{tpu_custom_call.1}
  #allocation0 [shape = 'u32[]', space=smem, size = 0x4, offset = 0x4, fixed_abs, tag = 'smem constant byte address 0x4 - core index']
  #allocation1 [shape = 'u32[72,128]{1,0:T(1,128)}', space=vmem, size = 0x9000, scoped, tag = 'internal scratch']
  #allocation2 [shape = 'f32[8,128]{1,0:T(8,128)}', space=vmem, size = 0x1000, scoped, tag = 'scratch operand']
  %s0 = inlined_call_operand.hbm [shape: f32[8,128], index: 0, kind: input, shape index: {}]
  %s1 = inlined_call_operand.hbm [shape: f32[128,128], index: 1, kind: input, shape index: {}]
  %s2 = inlined_call_operand.vmem [shape: f32[1,128], index: 2, kind: input, shape index: {}]
  %s3 = inlined_call_operand.hbm [shape: f32[128,128], index: 3, kind: input, shape index: {}]
  %s4 = inlined_call_operand.vmem [shape: f32[1,128], index: 4, kind: input, shape index: {}]
  %s5 = inlined_call_operand.hbm [shape: f32[8,128], index: 5, kind: output, shape index: {}]
  %s6 = sld [smem:[#allocation0]]
  $region50: #{tpu_custom_call.1} parent=0
    _
  %s8 = ssub.s32 1, %s6
  %s9 = scalar_select 0, %s8, %s6
  $region1: #{tpu_custom_call.1} parent=0
    #allocation3 [shape = 'u8[4096]{0}', space=vmem, size = 0x1000, scoped, tag = 'input window, operand 0, single buffered']
    #allocation4 [shape = 's32[1]{0}', space=sflag, size = 0x4, scoped, tag = 'scoped memory for tpu_custom_call.1']
    #allocation5 [shape = 's32[1]{0}', space=sflag, size = 0x4, scoped, tag = 'scoped memory for tpu_custom_call.1']
    #allocation6 [shape = 'u8[65536]{0}', space=vmem, size = 0x10000, scoped, tag = 'input window, operand 1, single buffered']
    #allocation7 [shape = 's32[1]{0}', space=sflag, size = 0x4, scoped, tag = 'scoped memory for tpu_custom_call.1']
    #allocation8 [shape = 'u8[65536]{0}', space=vmem, size = 0x10000, scoped, tag = 'input window, operand 3, single buffered']
    #allocation9 [shape = 'u8[4096]{0}', space=vmem, size = 0x1000, scoped, tag = 'output window, operand 0, single buffered']
    %10 = vsyncpa [#allocation4], 0
    %11 = vsyncpa [#allocation7], 0
    %12 = vsyncpa [#allocation5], 0
    // Predicated region
    $region2: #{tpu_custom_call.1} parent=1 // pred_check
      _
    $region3: #{tpu_custom_call.1} parent=1 // pred_check_branch
      %14 = sbr.rel (0) target = $region5
    $region4: #{tpu_custom_call.1} parent=1 // pred_region
      %16 = vsyncadd [#allocation4], 0
      %s18 = sshll.u32 %s0, 4
      %s19 = int_to_ptr.hbm [resolvable:$true] %s18
      %s20 = sshll.u32 [#allocation3], 4
      %s21 = int_to_ptr.vmem [resolvable:$true] %s20
      %23 = dma.hbm_to_vmem [thread:$0]  %s19, 128, %s21, [#allocation4]
    $region5: #{tpu_custom_call.1} parent=1 // pred_fallthru
      _
    // Predicated region
    $region6: #{tpu_custom_call.1} parent=1 // pred_check
      _
    $region7: #{tpu_custom_call.1} parent=1 // pred_check_branch
      %25 = sbr.rel (0) target = $region9
    $region8: #{tpu_custom_call.1} parent=1 // pred_region
      %27 = vsyncadd [#allocation7], 0
      %s28 = sshll.u32 %s1, 4
      %s29 = int_to_ptr.hbm [resolvable:$true] %s28
      %s30 = sshll.u32 [#allocation6], 4
      %s31 = int_to_ptr.vmem [resolvable:$true] %s30
      %36 = dma.hbm_to_vmem [thread:$0]  %s29, 2048, %s31, [#allocation7], 128, 128, 8
    $region9: #{tpu_custom_call.1} parent=1 // pred_fallthru
      _
    // Predicated region
    $region10: #{tpu_custom_call.1} parent=1 // pred_check
      _
    $region11: #{tpu_custom_call.1} parent=1 // pred_check_branch
      %38 = sbr.rel (0) target = $region13
    $region12: #{tpu_custom_call.1} parent=1 // pred_region
      _
    $region13: #{tpu_custom_call.1} parent=1 // pred_fallthru
      _
    // Predicated region
    $region14: #{tpu_custom_call.1} parent=1 // pred_check
      _
    $region15: #{tpu_custom_call.1} parent=1 // pred_check_branch
      %40 = sbr.rel (0) target = $region17
    $region16: #{tpu_custom_call.1} parent=1 // pred_region
      %42 = vsyncadd [#allocation7], 0
      %s43 = sshll.u32 %s3, 4
      %s44 = int_to_ptr.hbm [resolvable:$true] %s43
      %s45 = sshll.u32 [#allocation8], 4
      %s46 = int_to_ptr.vmem [resolvable:$true] %s45
      %51 = dma.hbm_to_vmem [thread:$0]  %s44, 2048, %s46, [#allocation7], 128, 128, 8
    $region17: #{tpu_custom_call.1} parent=1 // pred_fallthru
      _
    // Predicated region
    $region18: #{tpu_custom_call.1} parent=1 // pred_check
      _
    $region19: #{tpu_custom_call.1} parent=1 // pred_check_branch
      %53 = sbr.rel (0) target = $region21
    $region20: #{tpu_custom_call.1} parent=1 // pred_region
      _
    $region21: #{tpu_custom_call.1} parent=1 // pred_fallthru
      _
    // Predicated region
    $region22: #{tpu_custom_call.1} parent=1 // pred_check
      _
    $region23: #{tpu_custom_call.1} parent=1 // pred_check_branch
      %55 = sbr.rel (0) target = $region25
    $region24: #{tpu_custom_call.1} parent=1 // pred_region
      %57 = dma.done [#allocation4], 128
    $region25: #{tpu_custom_call.1} parent=1 // pred_fallthru
      _
    // Predicated region
    $region26: #{tpu_custom_call.1} parent=1 // pred_check
      _
    $region27: #{tpu_custom_call.1} parent=1 // pred_check_branch
      %59 = sbr.rel (0) target = $region29
    $region28: #{tpu_custom_call.1} parent=1 // pred_region
      %61 = dma.done [#allocation7], 2048
    $region29: #{tpu_custom_call.1} parent=1 // pred_fallthru
      _
    // Predicated region
    $region30: #{tpu_custom_call.1} parent=1 // pred_check
      _
    $region31: #{tpu_custom_call.1} parent=1 // pred_check_branch
      %63 = sbr.rel (0) target = $region33
    $region32: #{tpu_custom_call.1} parent=1 // pred_region
      %65 = dma.done [#allocation7], 2048
    $region33: #{tpu_custom_call.1} parent=1 // pred_fallthru
      _
    %v66 = vld [vmem:[#allocation3] sm:$0xff]
    %p67 = scmp.eq.s32.totalorder 0, 0
    // Predicated region
    $region34: #{tpu_custom_call.1} parent=1 // pred_check
      %p68 = pneg %p67
    $region35: #{tpu_custom_call.1} parent=1 // pred_check_branch
      %70 = sbr.rel (%p68) target = $region37
    $region36: #{tpu_custom_call.1} parent=1 // pred_region
      %v71 = vld [vmem:[%s4] sm:$0x1]
      %v73 = vperm.slane %v71, 0
      %v75 = vadd.f32 %v66, %v73
      %76 = vst [vmem:[#allocation2] sm:$0xff] %v75
    $region37: #{tpu_custom_call.1} parent=1 // pred_fallthru
      _
    %v77 = vld [vmem:[#allocation6] sm:$0xff]
    %v78 = vld [vmem:[#allocation6 + $0x8] sm:$0xff]
    %v79 = vld [vmem:[#allocation6 + $0x10] sm:$0xff]
    %v80 = vld [vmem:[#allocation6 + $0x18] sm:$0xff]
    %v81 = vld [vmem:[#allocation6 + $0x20] sm:$0xff]
    %v82 = vld [vmem:[#allocation6 + $0x28] sm:$0xff]
    %v83 = vld [vmem:[#allocation6 + $0x30] sm:$0xff]
    %v84 = vld [vmem:[#allocation6 + $0x38] sm:$0xff]
    %v85 = vld [vmem:[#allocation6 + $0x40] sm:$0xff]
    %v86 = vld [vmem:[#allocation6 + $0x48] sm:$0xff]
    %v87 = vld [vmem:[#allocation6 + $0x50] sm:$0xff]
    %v88 = vld [vmem:[#allocation6 + $0x58] sm:$0xff]
    %v89 = vld [vmem:[#allocation6 + $0x60] sm:$0xff]
    %v90 = vld [vmem:[#allocation6 + $0x68] sm:$0xff]
    %v91 = vld [vmem:[#allocation6 + $0x70] sm:$0xff]
    %v92 = vld [vmem:[#allocation6 + $0x78] sm:$0xff]
    %v93 = vld [vmem:[%s2] sm:$0x1]
    %v95 = vperm.slane %v93, 0
    %97 = vmatpush.msra.mxu0 %v92
    %98 = vmatpush.msra.mxu0 %v91
    %99 = vmatpush.msra.mxu0 %v90
    %100 = vmatpush.msra.mxu0 %v89
    %101 = vmatpush.msra.mxu0 %v88
    %102 = vmatpush.msra.mxu0 %v87
    %103 = vmatpush.msra.mxu0 %v86
    %104 = vmatpush.msra.mxu0 %v85
    %105 = vmatpush.msra.mxu0 %v84
    %106 = vmatpush.msra.mxu0 %v83
    %107 = vmatpush.msra.mxu0 %v82
    %108 = vmatpush.msra.mxu0 %v81
    %109 = vmatpush.msra.mxu0 %v80
    %110 = vmatpush.msra.mxu0 %v79
    %111 = vmatpush.msra.mxu0 %v78
    %112 = vmatpush.msra.mxu0 %v77
    %113 = vmatmul.f32.gmra.mxu0 %v66
    %v114 = vpop.f32.mrf.mxu0
    %v115 = vadd.f32 %v95, %v114
    %116 = vdwg.mxu0
    %v117 = vmul.f32 %v115, 0.5
    %v118 = vmul.f32 %v115, 0.70710677
    %v119 = vmul.f32 %v118, %v118
    %v120 = vmin.f32 16.0, %v119
    %v121 = vmul.f32 %v120, 2.1237322e-06
    %v122 = vadd.f32 %v121, 0.00028619796
    %v123 = vmul.f32 %v120, %v122
    %v124 = vadd.f32 %v123, 0.0036580483
    %v125 = vmul.f32 %v120, %v124
    %v126 = vadd.f32 %v125, 0.05243302
    %v127 = vmul.f32 %v120, %v126
    %v128 = vadd.f32 %v127, 0.18741608
    %v129 = vmul.f32 %v120, %v128
    %v130 = vadd.f32 %v129, 1.1283791
    %v131 = vmul.f32 %v118, %v130
    %v132 = vmul.f32 %v120, 3.8918573e-05
    %v133 = vadd.f32 %v132, 0.001143296
    %v134 = vmul.f32 %v120, %v133
    %v135 = vadd.f32 %v134, 0.014752088
    %v136 = vmul.f32 %v120, %v135
    %v137 = vadd.f32 %v136, 0.112945676
    %v138 = vmul.f32 %v120, %v137
    %v139 = vadd.f32 %v138, 0.4994258
    %v140 = vmul.f32 %v120, %v139
    %v141 = vadd.f32 %v140, 1.0
    %v142 = vrcp.pop %v141
    %v143 = vmul.f32 %v141, %v142
    %v144 = vsub.f32 1.0, %v143
    %v145 = vmul.f32 %v142, %v144
    %v146 = vadd.f32 %v142, %v145
    %vm147 = vweird.f32 %v141
    %vm148 = vweird.f32 %v142
    %vm149 = vmor %vm147, %vm148
    %v150 = vsel %vm149, %v142, %v146
    %v151 = vand.u32 2147483647, %v141
    %vm152 = vcmp.eq.f32.partialorder %v151, 8.507059e+37
    %v153 = vand.u32 %v141, 2147483648
    %v154 = vor.u32 1.1754944e-38, %v153
    %v155 = vsel %vm152, %v154, %v150
    %v156 = vmul.f32 %v131, %v155
    %v157 = vmin.f32 %v156, 1.0
    %v158 = vmax.f32 %v157, -1.0
    %v159 = vadd.f32 %v158, 1.0
    %v160 = vmul.f32 %v117, %v159
    %v161 = vld [vmem:[#allocation2] sm:$0xff]
    %v162 = vld [vmem:[#allocation8] sm:$0xff]
    %v163 = vld [vmem:[#allocation8 + $0x8] sm:$0xff]
    %v164 = vld [vmem:[#allocation8 + $0x10] sm:$0xff]
    %v165 = vld [vmem:[#allocation8 + $0x18] sm:$0xff]
    %v166 = vld [vmem:[#allocation8 + $0x20] sm:$0xff]
    %v167 = vld [vmem:[#allocation8 + $0x28] sm:$0xff]
    %v168 = vld [vmem:[#allocation8 + $0x30] sm:$0xff]
    %v169 = vld [vmem:[#allocation8 + $0x38] sm:$0xff]
    %v170 = vld [vmem:[#allocation8 + $0x40] sm:$0xff]
    %v171 = vld [vmem:[#allocation8 + $0x48] sm:$0xff]
    %v172 = vld [vmem:[#allocation8 + $0x50] sm:$0xff]
    %v173 = vld [vmem:[#allocation8 + $0x58] sm:$0xff]
    %v174 = vld [vmem:[#allocation8 + $0x60] sm:$0xff]
    %v175 = vld [vmem:[#allocation8 + $0x68] sm:$0xff]
    %v176 = vld [vmem:[#allocation8 + $0x70] sm:$0xff]
    %v177 = vld [vmem:[#allocation8 + $0x78] sm:$0xff]
    %178 = vmatpush.msra.mxu0 %v177
    %179 = vmatpush.msra.mxu0 %v176
    %180 = vmatpush.msra.mxu0 %v175
    %181 = vmatpush.msra.mxu0 %v174
    %182 = vmatpush.msra.mxu0 %v173
    %183 = vmatpush.msra.mxu0 %v172
    %184 = vmatpush.msra.mxu0 %v171
    %185 = vmatpush.msra.mxu0 %v170
    %186 = vmatpush.msra.mxu0 %v169
    %187 = vmatpush.msra.mxu0 %v168
    %188 = vmatpush.msra.mxu0 %v167
    %189 = vmatpush.msra.mxu0 %v166
    %190 = vmatpush.msra.mxu0 %v165
    %191 = vmatpush.msra.mxu0 %v164
    %192 = vmatpush.msra.mxu0 %v163
    %193 = vmatpush.msra.mxu0 %v162
    %194 = vmatmul.f32.gmra.mxu0 %v160
    %v195 = vpop.f32.mrf.mxu0
    %v196 = vadd.f32 0.0, %v195
    %197 = vdwg.mxu0
    %v198 = vadd.f32 %v161, %v196
    %199 = vst [vmem:[#allocation2] sm:$0xff] %v198
    // Predicated region
    $region38: #{tpu_custom_call.1} parent=1 // pred_check
      %p200 = pneg %p67
    $region39: #{tpu_custom_call.1} parent=1 // pred_check_branch
      %202 = sbr.rel (%p200) target = $region41
    $region40: #{tpu_custom_call.1} parent=1 // pred_region
      %v203 = vld [vmem:[#allocation2] sm:$0xff]
      %204 = vst [vmem:[#allocation9] sm:$0xff] %v203
    $region41: #{tpu_custom_call.1} parent=1 // pred_fallthru
      _
    // Predicated region
    $region42: #{tpu_custom_call.1} parent=1 // pred_check
      _
    $region43: #{tpu_custom_call.1} parent=1 // pred_check_branch
      %206 = sbr.rel (0) target = $region45
    $region44: #{tpu_custom_call.1} parent=1 // pred_region
      %208 = vsyncadd [#allocation5], 0
      %s210 = sshll.u32 [#allocation9], 4
      %s211 = int_to_ptr.vmem [resolvable:$true] %s210
      %s212 = sshll.u32 %s5, 4
      %s213 = int_to_ptr.hbm [resolvable:$true] %s212
      %215 = dma.vmem_to_hbm [thread:$0]  %s211, 128, %s213, [#allocation5]
    $region45: #{tpu_custom_call.1} parent=1 // pred_fallthru
      _
    // Predicated region
    $region46: #{tpu_custom_call.1} parent=1 // pred_check
      _
    $region47: #{tpu_custom_call.1} parent=1 // pred_check_branch
      %217 = sbr.rel (0) target = $region49
    $region48: #{tpu_custom_call.1} parent=1 // pred_region
      %219 = dma.done [#allocation5], 128
    $region49: #{tpu_custom_call.1} parent=1 // pred_fallthru
      _
    %220 = vsyncpa [#allocation4], 1
    %221 = vsyncpa [#allocation7], 1
    %222 = vsyncpa [#allocation5], 1

</llo_original>
